<compile_context>
chip_gen: v7x
topology: tpu7x:2x2x1
jax: 0.10.0
libtpu: 0.0.40
codegen_flags: <defaults>
</compile_context>

<pallas_src>
import functools

import jax
import jax.numpy as jnp
from jax import lax
from jax.experimental import pallas as pl
from jax.experimental.pallas import tpu as pltpu


def _conv_block_kernel(x_ref, wb_ref, o_ref, *, negative_slope):
    """One grid step = one block of `nb` batch elements.

    x_ref:  (nb, Ho, KH*Wp*Cin + 1)   H-im2col'd lane-dense input (+ ones lane)
    wb_ref: (KH*Wp*Cin + 1, Wo*Cout)  banded weight; BN scale folded into the
                                      weight columns, conv-bias + BN shift as
                                      the last K row (pairs with the ones lane)
    o_ref:  (nb, Ho, Wo*Cout)         lane-dense output slab
    """
    nb, h_out, kdim = x_ref.shape
    lanes = o_ref.shape[-1]

    x = x_ref[...].reshape(nb * h_out, kdim)          # (M, K) with M = nb*Ho
    # Single MXU push: all KH*KW taps, the Cin contraction, conv bias and
    # eval-mode BatchNorm fused into one matmul; f32 accumulation.
    acc = jnp.dot(x, wb_ref[...], preferred_element_type=jnp.float32)
    y = jnp.where(acc >= 0, acc, negative_slope * acc)  # LeakyReLU epilogue
    o_ref[...] = y.reshape(nb, h_out, lanes).astype(o_ref.dtype)


def _pick_batch_block(n, h_out):
    """Batch elements folded per grid step (grows matmul M = nb * Ho).

    Targets M ~ 128 rows but always keeps >= 2 grid steps when n >= 2 so that
    v7x's two TensorCores each get a 'parallel' step and the input/output
    pipeline has something to overlap (v5e/v6e just need >= 2 steps total).
    """
    cap = max(1, min(128 // max(h_out, 1), n // 2 if n >= 2 else 1))
    nb = 1
    for d in range(1, n + 1):
        if n % d == 0 and d <= cap:
            nb = d
    return nb


def prepare_conv_block_params(weight_hwio, bias, bn_gamma, bn_beta, bn_mean,
                              bn_var, *, kernel_size, input_width, stride=1,
                              dilation=1, eps=1e-5, negative_slope=0.2,
                              compute_dtype=jnp.bfloat16):
    """Build the fused banded weight ONCE per weight set (off the hot path).

    wb[(kh, wi, ci), (wo, co)] = W[kh, kw, ci, co] * scale[co]
        iff wi == wo*stride + kw*dilation   (exact 0/1 masking in f32)
    plus one extra K row holding shift[co] = beta + (bias - mean) * scale,
    which pairs with a constant-1 lane appended to the input, so conv bias +
    eval-mode BatchNorm ride the same matmul (no VPU scale/shift epilogue).
    """
    kh_sz, kw_sz, c_in, c_out = weight_hwio.shape
    pad = kernel_size // 2
    w = input_width
    wp = w + 2 * pad
    w_out = (w + 2 * pad - dilation * (kw_sz - 1) - 1) // stride + 1

    inv_std = 1.0 / jnp.sqrt(bn_var.astype(jnp.float32) + eps)
    scale = bn_gamma.astype(jnp.float32) * inv_std                    # (Cout,)
    shift = (bn_beta.astype(jnp.float32)
             + (bias.astype(jnp.float32) - bn_mean.astype(jnp.float32)) * scale)

    wi = jnp.arange(wp)
    wo = jnp.arange(w_out)
    kw = jnp.arange(kw_sz)
    sel = (wi[None, :, None]
           == wo[None, None, :] * stride + kw[:, None, None] * dilation)
    sel = sel.astype(jnp.float32)                                   # (KW,Wp,Wo)
    w_scaled = weight_hwio.astype(jnp.float32) * scale              # BN scale folded
    # (KH, KW, Wp, Cin, Wo, Cout) summed over KW -> (KH, Wp, Cin, Wo, Cout)
    band = (sel[None, :, :, None, :, None]
            * w_scaled[:, :, None, :, None, :]).sum(axis=1)
    wb = band.reshape(kh_sz * wp * c_in, w_out * c_out)
    shift_row = jnp.tile(shift, w_out).reshape(1, w_out * c_out)     # bias+BN shift
    wb = jnp.concatenate([wb, shift_row], axis=0).astype(compute_dtype)

    return dict(wb=wb, kernel_size=kernel_size, kh_sz=kh_sz, kw_sz=kw_sz,
                c_in=c_in, c_out=c_out, stride=stride, dilation=dilation,
                pad=pad, input_width=w, wp=wp, w_out=w_out,
                negative_slope=negative_slope, compute_dtype=compute_dtype)


def conv_block_apply(params, x_nchw, *, output_layout="NCHW"):
    """ConvBlock forward using precomputed `params` (see prepare_...).

    x_nchw: (N, Cin, H, W) float32.  Returns NCHW (default) or NHWC.
    """
    n, c_in, h, w = x_nchw.shape
    assert c_in == params["c_in"], (c_in, params["c_in"])
    assert w == params["input_width"], (w, params["input_width"])

    kh_sz = params["kh_sz"]
    stride, dilation, pad = params["stride"], params["dilation"], params["pad"]
    wp, w_out, c_out = params["wp"], params["w_out"], params["c_out"]
    compute_dtype = params["compute_dtype"]

    hp = h + 2 * pad
    h_out = (h + 2 * pad - dilation * (kh_sz - 1) - 1) // stride + 1

    # ---- wrapper-side layout plumbing (plain JAX, no compute hoisting) ----
    # NCHW -> NHWC, zero-pad spatially, fuse (W, Cin) into one lane-dense axis,
    # stack the KH shifted row windows (H-im2col) so the kernel does ONE
    # matmul, and append the constant-1 lane that pairs with wb's shift row.
    x_nhwc = jnp.transpose(x_nchw, (0, 2, 3, 1))
    x_pad = jnp.pad(x_nhwc, ((0, 0), (pad, pad), (pad, pad), (0, 0)))
    x_fused = x_pad.reshape(n, hp, wp * c_in)
    taps = [x_fused[:, kh * dilation: kh * dilation + stride * (h_out - 1) + 1: stride, :]
            for kh in range(kh_sz)]
    x_im2col = jnp.stack(taps, axis=2).reshape(n, h_out, kh_sz * wp * c_in)
    ones = jnp.ones((n, h_out, 1), x_im2col.dtype)
    x2 = jnp.concatenate([x_im2col, ones], axis=-1).astype(compute_dtype)

    kdim = kh_sz * wp * c_in + 1
    lanes = w_out * c_out          # lane-dense output; unmasked vst iff % 128 == 0
    nb = _pick_batch_block(n, h_out)

    kernel = functools.partial(_conv_block_kernel,
                               negative_slope=params["negative_slope"])

    out_slab = pl.pallas_call(
        kernel,
        out_shape=jax.ShapeDtypeStruct((n, h_out, lanes), jnp.float32),
        grid_spec=pltpu.PrefetchScalarGridSpec(
            num_scalar_prefetch=0,
            grid=(n // nb,),
            in_specs=[
                pl.BlockSpec((nb, h_out, kdim), lambda b: (b, 0, 0)),
                # Grid-invariant banded weight: single-buffered (index_map is
                # constant across the grid, double-buffering buys nothing).
                pl.BlockSpec((kdim, lanes), lambda b: (0, 0),
                             pipeline_mode=pl.Buffered(1)),
            ],
            out_specs=pl.BlockSpec((nb, h_out, lanes), lambda b: (b, 0, 0)),
        ),
        compiler_params=pltpu.CompilerParams(
            dimension_semantics=("parallel",),
            # Ample for this shape. For production tiles: size against
            # ~48-56 MiB usable VMEM on v7x (64 MiB physical) and raise toward
            # ~100 MiB on v5e/v6e (128 MiB physical).
            vmem_limit_bytes=32 * 1024 * 1024),
    )(x2, params["wb"])

    # (N, Ho, Wo*Cout) -> (N, Ho, Wo, Cout).
    out_nhwc = out_slab.reshape(n, h_out, w_out, c_out)
    if output_layout == "NHWC":
        return out_nhwc
    return jnp.transpose(out_nhwc, (0, 3, 1, 2))     # match PyTorch NCHW


def conv_block_forward(x_nchw, weight_hwio, bias, bn_gamma, bn_beta,
                       bn_mean, bn_var, *, kernel_size, stride=1, dilation=1,
                       eps=1e-5, negative_slope=0.2,
                       compute_dtype=jnp.bfloat16, output_layout="NCHW"):
    """Convenience one-shot wrapper: prepare params then apply.

    For inference with fixed weights, call prepare_conv_block_params() once
    and conv_block_apply() per batch instead (keeps band construction off the
    hot path).
    """
    params = prepare_conv_block_params(
        weight_hwio, bias, bn_gamma, bn_beta, bn_mean, bn_var,
        kernel_size=kernel_size, input_width=x_nchw.shape[3], stride=stride,
        dilation=dilation, eps=eps, negative_slope=negative_slope,
        compute_dtype=compute_dtype)
    return conv_block_apply(params, x_nchw, output_layout=output_layout)


def _reference(x_nchw, weight_hwio, bias, bn_gamma, bn_beta, bn_mean, bn_var,
               *, stride, pad, dilation, eps=1e-5, negative_slope=0.2):
    """Pure-JAX reference (lax.conv_general_dilated) for validation."""
    x_nhwc = jnp.transpose(x_nchw, (0, 2, 3, 1))
    y = lax.conv_general_dilated(
        x_nhwc, weight_hwio,
        window_strides=(stride, stride),
        padding=((pad, pad), (pad, pad)),
        rhs_dilation=(dilation, dilation),
        dimension_numbers=("NHWC", "HWIO", "NHWC"),
        precision=lax.Precision.HIGHEST)
    y = y + bias
    y = (y - bn_mean) / jnp.sqrt(bn_var + eps) * bn_gamma + bn_beta
    y = jnp.where(y >= 0, y, negative_slope * y)
    return jnp.transpose(y, (0, 3, 1, 2))


if __name__ == "__main__":
    # ConvBlock(in_channels=4, out_channels=8, kernel_size=3, stride=1,
    #           use_batch_norm=True, activation=LeakyReLU(0.2))
    N, C_IN, H, W = 2, 4, 16, 16
    C_OUT, K, STRIDE, DILATION = 8, 3, 1, 1
    PAD = K // 2

    key = jax.random.PRNGKey(0)
    kx, kw_, kb, kg, kbt, km, kv = jax.random.split(key, 7)

    x = jax.random.normal(kx, (N, C_IN, H, W), dtype=jnp.float32)
    weight = jax.random.normal(kw_, (K, K, C_IN, C_OUT), dtype=jnp.float32) * 0.1
    bias = jax.random.normal(kb, (C_OUT,), dtype=jnp.float32) * 0.1
    bn_gamma = 1.0 + 0.1 * jax.random.normal(kg, (C_OUT,), dtype=jnp.float32)
    bn_beta = 0.1 * jax.random.normal(kbt, (C_OUT,), dtype=jnp.float32)
    bn_mean = 0.1 * jax.random.normal(km, (C_OUT,), dtype=jnp.float32)
    bn_var = jnp.abs(1.0 + 0.1 * jax.random.normal(kv, (C_OUT,),
                                                   dtype=jnp.float32))

    ref = _reference(x, weight, bias, bn_gamma, bn_beta, bn_mean, bn_var,
                     stride=STRIDE, pad=PAD, dilation=DILATION)

    # --- f32 operand path: tight numerical check ---------------------------
    params_f32 = prepare_conv_block_params(
        weight, bias, bn_gamma, bn_beta, bn_mean, bn_var,
        kernel_size=K, input_width=W, stride=STRIDE, dilation=DILATION,
        compute_dtype=jnp.float32)
    out_f32 = jax.block_until_ready(conv_block_apply(params_f32, x))
    assert out_f32.shape == (N, C_OUT, H, W), out_f32.shape
    err_f32 = float(jnp.max(jnp.abs(out_f32 - ref)))
    assert err_f32 < 1e-4, f"f32 max abs error too large: {err_f32}"

    # --- bf16 operand path (default; MXU-native, f32 accumulation) ---------
    # Params prepared ONCE per weight set, reused across forward calls.
    params_bf16 = prepare_conv_block_params(
        weight, bias, bn_gamma, bn_beta, bn_mean, bn_var,
        kernel_size=K, input_width=W, stride=STRIDE, dilation=DILATION)
    out_bf16 = jax.block_until_ready(conv_block_apply(params_bf16, x))
    assert out_bf16.shape == (N, C_OUT, H, W), out_bf16.shape
    err_bf16 = float(jnp.max(jnp.abs(out_bf16 - ref)))
    assert err_bf16 < 5e-2, f"bf16 max abs error too large: {err_bf16}"

    # Convenience one-shot wrapper still works.
    out_once = jax.block_until_ready(conv_block_forward(
        x, weight, bias, bn_gamma, bn_beta, bn_mean, bn_var,
        kernel_size=K, stride=STRIDE, dilation=DILATION))
    assert out_once.shape == (N, C_OUT, H, W)

    print("KERNEL_OK")
</pallas_src>

<mosaic_0001>
module attributes {stable_mosaic.version = 11 : i64} {
  func.func @_conv_block_kernel(%arg0: i32, %arg1: memref<1x16x217xf32, #tpu.memory_space<vmem>>, %arg2: memref<217x128xf32, #tpu.memory_space<vmem>>, %arg3: memref<1x16x128xf32, #tpu.memory_space<vmem>>) attributes {dimension_semantics = [#tpu.dimension_semantics<parallel>], iteration_bounds = array<i64: 2>, scalar_prefetch = 0 : i64, scratch_operands = 0 : i64, tpu.core_type = #tpu.core_type<tc>, window_params = [{transform_indices = @transform_0, window_bounds = array<i64: 1, 16, 217>}, {pipeline_mode = #tpu.pipeline_mode<synchronous>, transform_indices = @transform_1, window_bounds = array<i64: 217, 128>}, {transform_indices = @transform_2, window_bounds = array<i64: 1, 16, 128>}]} {
    %c0 = arith.constant 0 : index
    %c0_0 = arith.constant 0 : index
    %c0_1 = arith.constant 0 : index
    %0 = vector.load %arg1[%c0, %c0_0, %c0_1] : memref<1x16x217xf32, #tpu.memory_space<vmem>>, vector<1x16x217xf32>
    %1 = vector.shape_cast %0 : vector<1x16x217xf32> to vector<16x217xf32>
    %c0_2 = arith.constant 0 : index
    %c0_3 = arith.constant 0 : index
    %2 = vector.load %arg2[%c0_2, %c0_3] : memref<217x128xf32, #tpu.memory_space<vmem>>, vector<217x128xf32>
    %cst = arith.constant dense<0.000000e+00> : vector<16x128xf32>
    %3 = tpu.matmul %1, %2, %cst {dimension_numbers = #tpu.dot_dimension_numbers<[1], [0], [0], [1], [0, 0, 1, 1], [], []>} : vector<16x217xf32>, vector<217x128xf32>, vector<16x128xf32> -> vector<16x128xf32>
    %cst_4 = arith.constant 0.000000e+00 : f32
    %4 = vector.broadcast %cst_4 : f32 to vector<16x128xf32>
    %5 = arith.cmpf oge, %3, %4 : vector<16x128xf32>
    %cst_5 = arith.constant 2.000000e-01 : f32
    %6 = vector.broadcast %cst_5 : f32 to vector<16x128xf32>
    %7 = arith.mulf %6, %3 : vector<16x128xf32>
    %8 = arith.select %5, %3, %7 : vector<16x128xi1>, vector<16x128xf32>
    %9 = vector.shape_cast %8 : vector<16x128xf32> to vector<1x16x128xf32>
    %c0_6 = arith.constant 0 : index
    %c0_7 = arith.constant 0 : index
    %c0_8 = arith.constant 0 : index
    %10 = vector.load %arg3[%c0_6, %c0_7, %c0_8] : memref<1x16x128xf32, #tpu.memory_space<vmem>>, vector<1x16x128xf32>
    tpu.vector_store %arg3[%c0_6, %c0_7, %c0_8], %9 {strides = array<i32>} : memref<1x16x128xf32, #tpu.memory_space<vmem>>, vector<1x16x128xf32>,
    return
  }
  func.func @transform_0(%arg0: i32) -> (i32, i32, i32) {
    %c0_i32 = arith.constant 0 : i32
    %c0_i32_0 = arith.constant 0 : i32
    %c0_i32_1 = arith.constant 0 : i32
    return %arg0, %c0_i32, %c0_i32_0 : i32, i32, i32
  }
  func.func @transform_1(%arg0: i32) -> (i32, i32) {
    %c0_i32 = arith.constant 0 : i32
    %c0_i32_0 = arith.constant 0 : i32
    %c0_i32_1 = arith.constant 0 : i32
    return %c0_i32, %c0_i32_0 : i32, i32
  }
  func.func @transform_2(%arg0: i32) -> (i32, i32, i32) {
    %c0_i32 = arith.constant 0 : i32
    %c0_i32_0 = arith.constant 0 : i32
    %c0_i32_1 = arith.constant 0 : i32
    return %arg0, %c0_i32, %c0_i32_0 : i32, i32, i32
  }
}

</mosaic_0001>

<llo_original>
// kernel: tpu_custom_call.1
$region0: #{tpu_custom_call.1}
  #allocation0 [shape = 'u32[]', space=smem, size = 0x4, offset = 0x4, fixed_abs, tag = 'smem constant byte address 0x4 - core index']
  #allocation1 [shape = 'u32[144,128]{1,0:T(1,128)}', space=vmem, size = 0x12000, scoped, tag = 'internal scratch']
  %s0 = inlined_call_operand.hbm [shape: f32[2,16,217], index: 0, kind: input, shape index: {}]
  %s1 = inlined_call_operand.hbm [shape: f32[217,128], index: 1, kind: input, shape index: {}]
  %s2 = inlined_call_operand.hbm [shape: f32[2,16,128], index: 2, kind: output, shape index: {}]
  %s3 = sld [smem:[#allocation0]]
  $region49: #{tpu_custom_call.1} parent=0
    _
  %s5 = ssub.s32 1, %s3
  %s6 = scalar_select 0, %s5, %s3
  $region1: #{tpu_custom_call.1} parent=0
    #allocation2 [shape = 'u8[32768]{0}', space=vmem, size = 0x8000, scoped, tag = 'input window, operand 0']
    #allocation3 [shape = 's32[2]{0}', space=sflag, size = 0x8, scoped, tag = 'scoped memory for tpu_custom_call.1']
    #allocation4 [shape = 's32[2]{0}', space=sflag, size = 0x8, scoped, tag = 'scoped memory for tpu_custom_call.1']
    #allocation5 [shape = 'u8[114688]{0}', space=vmem, size = 0x1c000, scoped, tag = 'input window, operand 1, single buffered']
    #allocation6 [shape = 's32[1]{0}', space=sflag, size = 0x4, scoped, tag = 'scoped memory for tpu_custom_call.1']
    #allocation7 [shape = 'u8[16384]{0}', space=vmem, size = 0x4000, scoped, tag = 'output window, operand 0']
    %7 = vsyncpa [#allocation3], 0
    %s8 = scalar_lea.sflag [#allocation3], 1
    %9 = vsyncpa %s8, 0
    %10 = vsyncpa [#allocation6], 0
    %11 = vsyncpa [#allocation4], 0
    %s12 = scalar_lea.sflag [#allocation4], 1
    %13 = vsyncpa %s12, 0
    loop: start=0, step=1, limit=4
    $region2: #{tpu_custom_call.1} parent=1 // loop_pre_header
      _
    $region3: #{tpu_custom_call.1} parent=1 // loop_header
      %s15 = sphi 0, %s19
      %p16 = scmp.ge.s32.totalorder %s15, 4
      %s25 = sphi 0, %s27
      %s28 = sphi 0, %s25
      %s29 = sphi 0, %s28
      %s45 = sphi 0, %s29
      %s49 = sphi 0, %s49
      %s51 = sphi 0, %s49
      %s52 = sphi 0, %s51
      %s66 = sphi 0, %s52
      %s72 = sphi 0, %s74
      %s75 = sphi 0, %s72
      %s76 = sphi 0, %s75
      %s92 = sphi 0, %s76
    $region4: #{tpu_custom_call.1} parent=1 // loop_header_branch
      %18 = sbr.rel (%p16) target = $region8
    $region5: #{tpu_custom_call.1} parent=1 // loop_body
      %s20 = ssub.s32 %s15, 1
      %s21 = ssub.s32 %s15, 2
      %s22 = sadd.s32 %s15, 1
      %s23 = ssub.s32 %s15, %s22
      %p24 = scmp.eq.s32.totalorder %s23, 0
      %s26 = sadd.s32 %s25, 1
      %s27 = scalar_select %p24, %s25, %s26
      %p30 = pneg %p24
      %p31 = scmp.eq.s32.totalorder %s15, 1
      %p32 = por %p30, %p31
      %p33 = scmp.ne.s32.totalorder %s25, %s28
      %p34 = scmp.eq.s32.totalorder %s15, 0
      %p35 = por %p33, %p34
      %p36 = scmp.ne.s32.totalorder %s25, %s28
      %p37 = scmp.eq.s32.totalorder %s20, 1
      %p38 = por %p36, %p37
      %p39 = scmp.ne.s32.totalorder %s28, %s29
      %p40 = scmp.eq.s32.totalorder %s20, 0
      %p41 = por %p39, %p40
      %p42 = scmp.ne.s32.totalorder %s28, %s29
      %p43 = scmp.eq.s32.totalorder %s21, 1
      %p44 = por %p42, %p43
      %p46 = scmp.ne.s32.totalorder %s29, %s45
      %p47 = scmp.eq.s32.totalorder %s21, 0
      %p48 = por %p46, %p47
      %s50 = sadd.s32 %s49, 1
      %p53 = scmp.eq.s32.totalorder %s15, 1
      %p54 = scmp.ne.s32.totalorder %s49, %s51
      %p55 = scmp.eq.s32.totalorder %s15, 0
      %p56 = por %p54, %p55
      %p57 = scmp.ne.s32.totalorder %s49, %s51
      %p58 = scmp.eq.s32.totalorder %s20, 1
      %p59 = por %p57, %p58
      %p60 = scmp.ne.s32.totalorder %s51, %s52
      %p61 = scmp.eq.s32.totalorder %s20, 0
      %p62 = por %p60, %p61
      %p63 = scmp.ne.s32.totalorder %s51, %s52
      %p64 = scmp.eq.s32.totalorder %s21, 1
      %p65 = por %p63, %p64
      %p67 = scmp.ne.s32.totalorder %s52, %s66
      %p68 = scmp.eq.s32.totalorder %s21, 0
      %p69 = por %p67, %p68
      %s70 = ssub.s32 %s15, %s22
      %p71 = scmp.eq.s32.totalorder %s70, 0
      %s73 = sadd.s32 %s72, 1
      %s74 = scalar_select %p71, %s72, %s73
      %p77 = pneg %p71
      %p78 = scmp.eq.s32.totalorder %s15, 1
      %p79 = por %p77, %p78
      %p80 = scmp.ne.s32.totalorder %s72, %s75
      %p81 = scmp.eq.s32.totalorder %s15, 0
      %p82 = por %p80, %p81
      %p83 = scmp.ne.s32.totalorder %s72, %s75
      %p84 = scmp.eq.s32.totalorder %s20, 1
      %p85 = por %p83, %p84
      %p86 = scmp.ne.s32.totalorder %s75, %s76
      %p87 = scmp.eq.s32.totalorder %s20, 0
      %p88 = por %p86, %p87
      %p89 = scmp.ne.s32.totalorder %s75, %s76
      %p90 = scmp.eq.s32.totalorder %s21, 1
      %p91 = por %p89, %p90
      %p93 = scmp.ne.s32.totalorder %s76, %s92
      %p94 = scmp.eq.s32.totalorder %s21, 0
      %p95 = por %p93, %p94
      %p96 = scmp.le.s32.totalorder 1, %s15
      %p97 = scmp.lt.s32.totalorder %s15, 3
      %p98 = pnand %p96, %p97
      %p99 = pneg %p98
      // Predicated region
      $region9: #{tpu_custom_call.1} parent=5 // pred_check
        _
      $region10: #{tpu_custom_call.1} parent=5 // pred_check_branch
        %101 = sbr.rel (%p98) target = $region12
      $region11: #{tpu_custom_call.1} parent=5 // pred_region
        %s102 = ssub.s32 %s15, 1
        // Predicated region
        $region13: #{tpu_custom_call.1} parent=11 // pred_check
          %p103 = pneg %p62
        $region14: #{tpu_custom_call.1} parent=11 // pred_check_branch
          %105 = sbr.rel (%p103) target = $region16
        $region15: #{tpu_custom_call.1} parent=11 // pred_region
          %s107 = ssub.s32 3584, 3584
          %108 = vsyncadd [#allocation6], %s107
          %s109 = sshll.u32 [#allocation5], 4
          %s110 = int_to_ptr.vmem [resolvable:$true] %s109
          %115 = dma.hbm_to_vmem [thread:$0]  %s1, 3584, %s110, [#allocation6], 128, 128, 8
        $region16: #{tpu_custom_call.1} parent=11 // pred_fallthru
          _
      $region12: #{tpu_custom_call.1} parent=5 // pred_fallthru
        _
      %p116 = scmp.lt.s32.totalorder %s15, 2
      // Predicated region
      $region17: #{tpu_custom_call.1} parent=5 // pred_check
        %p117 = pneg %p116
      $region18: #{tpu_custom_call.1} parent=5 // pred_check_branch
        %119 = sbr.rel (%p117) target = $region20
      $region19: #{tpu_custom_call.1} parent=5 // pred_region
        // Predicated region
        $region21: #{tpu_custom_call.1} parent=19 // pred_check
          %p120 = pneg %p35
        $region22: #{tpu_custom_call.1} parent=19 // pred_check_branch
          %122 = sbr.rel (%p120) target = $region24
        $region23: #{tpu_custom_call.1} parent=19 // pred_region
          %s123 = sand.u32 %s25, 1
          %s124 = scalar_lea.sflag [#allocation3], %s123
          %s125 = sand.u32 %s25, 1
          %s126 = smul.addr %s125, 32
          %s127 = scalar_lea.vmem [#allocation2], %s126
          %s129 = ssub.s32 512, 512
          %130 = vsyncadd %s124, %s129
          %s131 = smul.addr %s15, 4
          %s132 = smul.addr %s131, 128
          %s133 = scalar_lea.hbm %s0, %s132
          %s134 = sshll.u32 %s127, 4
          %s135 = int_to_ptr.vmem [resolvable:$true] %s134
          %140 = dma.hbm_to_vmem [thread:$0]  %s133, 512, %s135, %s124, 256, 256, 16
        $region24: #{tpu_custom_call.1} parent=19 // pred_fallthru
          _
      $region20: #{tpu_custom_call.1} parent=5 // pred_fallthru
        _
      %p141 = scmp.le.s32.totalorder 1, %s15
      %p142 = scmp.lt.s32.totalorder %s15, 3
      %p143 = pnand %p141, %p142
      %p144 = pneg %p143
      // Predicated region
      $region25: #{tpu_custom_call.1} parent=5 // pred_check
        _
      $region26: #{tpu_custom_call.1} parent=5 // pred_check_branch
        %146 = sbr.rel (%p143) target = $region28
      $region27: #{tpu_custom_call.1} parent=5 // pred_region
        %s147 = ssub.s32 %s15, 1
        %s148 = sand.u32 %s28, 1
        %s149 = scalar_lea.sflag [#allocation3], %s148
        %s150 = sand.u32 %s28, 1
        %s151 = smul.addr %s150, 32
        %s152 = scalar_lea.vmem [#allocation2], %s151
        // Predicated region
        $region29: #{tpu_custom_call.1} parent=27 // pred_check
          %p153 = pneg %p41
        $region30: #{tpu_custom_call.1} parent=27 // pred_check_branch
          %155 = sbr.rel (%p153) target = $region32
        $region31: #{tpu_custom_call.1} parent=27 // pred_region
          %156 = dma.done %s149, 512
        $region32: #{tpu_custom_call.1} parent=27 // pred_fallthru
          _
        // Predicated region
        $region33: #{tpu_custom_call.1} parent=27 // pred_check
          %p157 = pneg %p62
        $region34: #{tpu_custom_call.1} parent=27 // pred_check_branch
          %159 = sbr.rel (%p157) target = $region36
        $region35: #{tpu_custom_call.1} parent=27 // pred_region
          %160 = dma.done [#allocation6], 3584
        $region36: #{tpu_custom_call.1} parent=27 // pred_fallthru
          _
        %s161 = sand.u32 %s28, 1
        %s162 = scalar_lea.sflag [#allocation3], %s161
        %s163 = sand.u32 %s28, 1
        %s164 = smul.addr %s163, 32
        %s165 = scalar_lea.vmem [#allocation2], %s164
        %p166 = pneg %p41
        %p167 = pneg %p38
        %p168 = pneg %p62
        %p169 = pneg %p59
        %p170 = pneg %p88
        %p171 = pneg %p85
        %s172 = sand.u32 %s75, 1
        %s173 = scalar_lea.sflag [#allocation4], %s172
        %s174 = sand.u32 %s75, 1
        %s175 = smul.addr %s174, 16
        %s176 = scalar_lea.vmem [#allocation7], %s175
        %v177 = vld [vmem:[%s152] sm:$0xff]
        %v178 = vld [vmem:[%s152 + $0x8] sm:$0xff]
        %v179 = vld [vmem:[%s152 + $0x10] sm:$0xff]
        %v180 = vld [vmem:[%s152 + $0x18] sm:$0xff]
        %v181 = vld [vmem:[#allocation5] sm:$0xff]
        %v182 = vld [vmem:[#allocation5 + $0x8] sm:$0xff]
        %v183 = vld [vmem:[#allocation5 + $0x10] sm:$0xff]
        %v184 = vld [vmem:[#allocation5 + $0x18] sm:$0xff]
        %v185 = vld [vmem:[#allocation5 + $0x20] sm:$0xff]
        %v186 = vld [vmem:[#allocation5 + $0x28] sm:$0xff]
        %v187 = vld [vmem:[#allocation5 + $0x30] sm:$0xff]
        %v188 = vld [vmem:[#allocation5 + $0x38] sm:$0xff]
        %v189 = vld [vmem:[#allocation5 + $0x40] sm:$0xff]
        %v190 = vld [vmem:[#allocation5 + $0x48] sm:$0xff]
        %v191 = vld [vmem:[#allocation5 + $0x50] sm:$0xff]
        %v192 = vld [vmem:[#allocation5 + $0x58] sm:$0xff]
        %v193 = vld [vmem:[#allocation5 + $0x60] sm:$0xff]
        %v194 = vld [vmem:[#allocation5 + $0x68] sm:$0xff]
        %v195 = vld [vmem:[#allocation5 + $0x70] sm:$0xff]
        %v196 = vld [vmem:[#allocation5 + $0x78] sm:$0xff]
        %v197 = vld [vmem:[#allocation5 + $0x80] sm:$0xff]
        %v198 = vld [vmem:[#allocation5 + $0x88] sm:$0xff]
        %v199 = vld [vmem:[#allocation5 + $0x90] sm:$0xff]
        %v200 = vld [vmem:[#allocation5 + $0x98] sm:$0xff]
        %v201 = vld [vmem:[#allocation5 + $0xa0] sm:$0xff]
        %v202 = vld [vmem:[#allocation5 + $0xa8] sm:$0xff]
        %v203 = vld [vmem:[#allocation5 + $0xb0] sm:$0xff]
        %v204 = vld [vmem:[#allocation5 + $0xb8] sm:$0xff]
        %v205 = vld [vmem:[#allocation5 + $0xc0] sm:$0xff]
        %v206 = vld [vmem:[#allocation5 + $0xc8] sm:$0xff]
        %v207 = vld [vmem:[#allocation5 + $0xd0] sm:$0xff]
        %v208 = vld [vmem:[#allocation5 + $0xd8] sm:$0x1]
        %vm209 = vcmask 728064
        %v211 = vsel %vm209, %v178, 0
        %v214 = vsel %vm209, %v180, 0
        %vm216 = vcmask 1040384
        %v218 = vsel %vm216, %v208, 0
        %220 = vmatprep.subr.mxu0 0.0
        %221 = vmatpush1.msra.mxu0 %v181
        %222 = vmatprep.subr.mxu0 0.0
        %223 = vmatpush1.msra.mxu0 %v182
        %224 = vmatprep.subr.mxu0 0.0
        %225 = vmatpush1.msra.mxu0 %v183
        %226 = vmatprep.subr.mxu0 0.0
        %227 = vmatpush1.msra.mxu0 %v184
        %228 = vmatprep.subr.mxu0 0.0
        %229 = vmatpush1.msra.mxu0 %v185
        %230 = vmatprep.subr.mxu0 0.0
        %231 = vmatpush1.msra.mxu0 %v186
        %232 = vmatprep.subr.mxu0 0.0
        %233 = vmatpush1.msra.mxu0 %v187
        %234 = vmatprep.subr.mxu0 0.0
        %235 = vmatpush1.msra.mxu0 %v188
        %236 = vmatprep.subr.mxu0 0.0
        %237 = vmatpush1.msra.mxu0 %v189
        %238 = vmatprep.subr.mxu0 0.0
        %239 = vmatpush1.msra.mxu0 %v190
        %240 = vmatprep.subr.mxu0 0.0
        %241 = vmatpush1.msra.mxu0 %v191
        %242 = vmatprep.subr.mxu0 0.0
        %243 = vmatpush1.msra.mxu0 %v192
        %244 = vmatprep.subr.mxu0 0.0
        %245 = vmatpush1.msra.mxu0 %v193
        %246 = vmatprep.subr.mxu0 0.0
        %247 = vmatpush1.msra.mxu0 %v194
        %248 = vmatprep.subr.mxu0 0.0
        %249 = vmatpush1.msra.mxu0 %v195
        %250 = vmatprep.subr.mxu0 0.0
        %251 = vmatpush1.msra.mxu0 %v196
        %252 = vmatprep.subr.mxu0 0.0
        %253 = vmatpush1.msra.mxu0 %v197
        %254 = vmatprep.subr.mxu0 0.0
        %255 = vmatpush1.msra.mxu0 %v198
        %256 = vmatprep.subr.mxu0 0.0
        %257 = vmatpush1.msra.mxu0 %v199
        %258 = vmatprep.subr.mxu0 0.0
        %259 = vmatpush1.msra.mxu0 %v200
        %260 = vmatprep.subr.mxu0 0.0
        %261 = vmatpush1.msra.mxu0 %v201
        %262 = vmatprep.subr.mxu0 0.0
        %263 = vmatpush1.msra.mxu0 %v202
        %264 = vmatprep.subr.mxu0 0.0
        %265 = vmatpush1.msra.mxu0 %v203
        %266 = vmatprep.subr.mxu0 0.0
        %267 = vmatpush1.msra.mxu0 %v204
        %268 = vmatprep.subr.mxu0 0.0
        %269 = vmatpush1.msra.mxu0 %v205
        %270 = vmatprep.subr.mxu0 0.0
        %271 = vmatpush1.msra.mxu0 %v206
        %272 = vmatprep.subr.mxu0 0.0
        %273 = vmatpush1.msra.mxu0 %v207
        %274 = vmatprep.subr.mxu0 0.0
        %275 = vmatpush1.msra.mxu0 %v218
        %276 = vmatprep.subr.mxu0 0.0
        %277 = vmatpush1.msra.mxu0 0.0
        %278 = vmatprep.subr.mxu0 0.0
        %279 = vmatpush1.msra.mxu0 0.0
        %280 = vmatprep.subr.mxu0 0.0
        %281 = vmatpush1.msra.mxu0 0.0
        %282 = vmatprep.subr.mxu0 0.0
        %283 = vmatpush1.msra.mxu0 0.0
        %284 = vmatprep.mubr.f32.mxu0 %v211
        %285 = vmatmul.mubr.f32.gmra.mrb[0].mxu0 %v177
        %v286 = vpop.f32.mrb[0].mxu0
        %v287 = vadd.f32 0.0, %v286
        %v288 = vpop.f32.mrb[0].mxu0
        %289 = vmatprep.mubr.f32.mxu0 %v214
        %290 = vmatmul.mubr.f32.gmra.mrb[0].mxu0 %v179
        %v291 = vpop.f32.mrb[0].mxu0
        %v292 = vadd.f32 0.0, %v291
        %v293 = vpop.f32.mrb[0].mxu0
        %294 = vdwg.mxu0
        %vm295 = vcmp.ge.f32.partialorder %v287, 0.0
        %vm296 = vcmp.ge.f32.partialorder %v292, 0.0
        %v297 = vmul.f32 %v287, 0.2
        %v298 = vmul.f32 %v292, 0.2
        %v299 = vsel %vm295, %v287, %v297
        %v300 = vsel %vm296, %v292, %v298
        %301 = vst [vmem:[%s176] sm:$0xff] %v299
        %302 = vst [vmem:[%s176 + $0x8] sm:$0xff] %v300
        %s303 = sand.u32 %s75, 1
        %s304 = scalar_lea.sflag [#allocation4], %s303
        %s305 = sand.u32 %s75, 1
        %s306 = smul.addr %s305, 16
        %s307 = scalar_lea.vmem [#allocation7], %s306
        // Predicated region
        $region37: #{tpu_custom_call.1} parent=27 // pred_check
          %p308 = pneg %p85
        $region38: #{tpu_custom_call.1} parent=27 // pred_check_branch
          %310 = sbr.rel (%p308) target = $region40
        $region39: #{tpu_custom_call.1} parent=27 // pred_region
          %s312 = ssub.s32 256, 256
          %313 = vsyncadd %s304, %s312
          %s314 = smul.addr %s20, 2
          %s315 = smul.addr %s314, 128
          %s316 = scalar_lea.hbm %s2, %s315
          %s317 = sshll.u32 %s307, 4
          %s318 = int_to_ptr.vmem [resolvable:$true] %s317
          %323 = dma.vmem_to_hbm [thread:$0]  %s318, 256, %s316, %s304, 128, 128, 8
        $region40: #{tpu_custom_call.1} parent=27 // pred_fallthru
          _
      $region28: #{tpu_custom_call.1} parent=5 // pred_fallthru
        _
      %p324 = scmp.le.s32.totalorder 2, %s15
      // Predicated region
      $region41: #{tpu_custom_call.1} parent=5 // pred_check
        %p325 = pneg %p324
      $region42: #{tpu_custom_call.1} parent=5 // pred_check_branch
        %327 = sbr.rel (%p325) target = $region44
      $region43: #{tpu_custom_call.1} parent=5 // pred_region
        %s328 = ssub.s32 %s15, 2
        // Predicated region
        $region45: #{tpu_custom_call.1} parent=43 // pred_check
          %p329 = pneg %p91
        $region46: #{tpu_custom_call.1} parent=43 // pred_check_branch
          %331 = sbr.rel (%p329) target = $region48
        $region47: #{tpu_custom_call.1} parent=43 // pred_region
          %s332 = sand.u32 %s76, 1
          %s333 = scalar_lea.sflag [#allocation4], %s332
          %s334 = sand.u32 %s76, 1
          %s335 = smul.addr %s334, 16
          %s336 = scalar_lea.vmem [#allocation7], %s335
          %337 = dma.done %s333, 256
        $region48: #{tpu_custom_call.1} parent=43 // pred_fallthru
          _
      $region44: #{tpu_custom_call.1} parent=5 // pred_fallthru
        _
    $region6: #{tpu_custom_call.1} parent=1 // loop_footer
      %s19 = sadd.s32 1, %s15
    $region7: #{tpu_custom_call.1} parent=1 // loop_footer_branch
      %14 = sbr.rel target = $region3
    $region8: #{tpu_custom_call.1} parent=1 // loop_exit
      _
    %338 = vsyncpa [#allocation3], 1
    %s339 = scalar_lea.sflag [#allocation3], 1
    %340 = vsyncpa %s339, 1
    %341 = vsyncpa [#allocation6], 1
    %342 = vsyncpa [#allocation4], 1
    %s343 = scalar_lea.sflag [#allocation4], 1
    %344 = vsyncpa %s343, 1

</llo_original>
